<compile_context>
chip_gen: v6e
topology: v6e:2x2x1
jax: 0.10.0
libtpu: 0.0.40
codegen_flags: <defaults>
</compile_context>

<pallas_src>
import functools

import jax
import jax.numpy as jnp
from jax.experimental import pallas as pl
from jax.experimental.pallas import tpu as pltpu

LANE = 128


def _round_up(d, m=LANE):
    return ((d + m - 1) // m) * m


def _pad_2d(a, rows, cols, dtype=jnp.float32):
    out = jnp.zeros((rows, cols), dtype)
    return out.at[: a.shape[0], : a.shape[1]].set(a.astype(dtype))


# ---------------------------------------------------------------------------
# Fused kernel: all GCN layers + classifier + log_softmax in one body.
# ---------------------------------------------------------------------------
def _fused_gcn_kernel(adj_ref, x_ref, *rest, num_gcn, dims):
    """rest = (w0, b0, w1, b1, ..., w_cls_T, b_cls, o_ref).
    Weights are bf16; biases are f32.  dims = padded (in_dim, out_dim) per GCN
    layer (static)."""
    o_ref = rest[-1]
    params = rest[:-1]

    adj = adj_ref[...]            # bf16 adjacency, loaded into VMEM exactly once
    h = x_ref[...]                # bf16 node features, resident on-chip

    for layer in range(num_gcn):
        w = params[2 * layer][...]         # (in_pad, out_pad) bf16
        b = params[2 * layer + 1][...]     # (1, out_pad)      f32
        d_in, d_out = dims[layer]
        if d_out >= d_in:
            # Aggregate first: the N x N matmul runs at the narrower input width.
            agg = jnp.dot(adj, h, preferred_element_type=jnp.float32)
            hf = jnp.dot(agg.astype(jnp.bfloat16), w,
                         preferred_element_type=jnp.float32) + b
        else:
            # Transform first: the N x N matmul runs at the narrower output width.
            sup = jnp.dot(h, w, preferred_element_type=jnp.float32)
            hf = jnp.dot(adj, sup.astype(jnp.bfloat16),
                         preferred_element_type=jnp.float32) + b
        if layer != num_gcn - 1:
            hf = jnp.maximum(hf, 0.0)      # ReLU epilogue in f32 (VPU)
        h = hf.astype(jnp.bfloat16)        # resident activations stay bf16
        # TODO(synk): F.dropout with training=True not implemented (inference-mode identity).

    # Classifier: logits = h @ W_cls^T + b_cls.  W_cls is pre-transposed to
    # (nout_pad, k_pad) at prep time -> plain canonical MXU matmul here.
    w_cls_t = params[2 * num_gcn][...]     # (nout_pad, k_pad) bf16
    b_cls = params[2 * num_gcn + 1][...]   # (1, k_pad) f32, padded classes = -1e30
    logits = jnp.dot(h, w_cls_t, preferred_element_type=jnp.float32) + b_cls

    # Numerically stable log_softmax over the (lane-dense, padded) class axis.
    m = jnp.max(logits, axis=-1, keepdims=True)
    z = logits - m
    lse = jnp.log(jnp.sum(jnp.exp(z), axis=-1, keepdims=True))
    o_ref[...] = (z - lse).astype(o_ref.dtype)


# ---------------------------------------------------------------------------
# Parameter / adjacency preparation (one-time padding + bf16 casts).
# ---------------------------------------------------------------------------
def init_gcn_linear_params(key, nfeat, nhid, nout, nlayers, K):
    """Deterministic parameter init mirroring the PyTorch module's shapes."""
    params = {}

    def gc_init(key, fan_in, fan_out):
        kw, kb = jax.random.split(key)
        stdv = 1.0 / jnp.sqrt(jnp.float32(fan_out))
        w = jax.random.uniform(kw, (fan_in, fan_out), jnp.float32, -stdv, stdv)
        b = jax.random.uniform(kb, (fan_out,), jnp.float32, -stdv, stdv)
        return w, b

    keys = jax.random.split(key, nlayers + 1)
    params["gcstart"] = gc_init(keys[0], nfeat, nhid)
    params["gcn_middle"] = [gc_init(keys[1 + i], nhid, nhid)
                            for i in range(nlayers - 2)]
    params["gcend"] = gc_init(keys[nlayers - 1], nhid, nout)

    # nn.Linear(nout, K): weight (K, nout), bias (K,)
    kw, kb = jax.random.split(keys[nlayers])
    bound = 1.0 / jnp.sqrt(jnp.float32(nout))
    w_cls = jax.random.uniform(kw, (K, nout), jnp.float32, -bound, bound)
    b_cls = jax.random.uniform(kb, (K,), jnp.float32, -bound, bound)
    params["classifier"] = (w_cls, b_cls)
    return params


def prepare_params(params, nfeat):
    """Zero-pad all weights to multiples of 128 and cast them to bf16 once.
    Biases stay f32 (added in the f32 epilogue).  The classifier weight is
    pre-transposed to (nout_pad, k_pad)."""
    gc = [params["gcstart"], *params["gcn_middle"], params["gcend"]]
    w_cls, b_cls = params["classifier"]
    k, nout = w_cls.shape

    f_pad = _round_up(nfeat)
    in_pad = f_pad
    flat = []
    dims = []
    for (w, b) in gc:
        d_in, d_out = w.shape
        out_pad = _round_up(d_out)
        flat.append(_pad_2d(w, in_pad, out_pad, jnp.bfloat16))          # W  (bf16)
        flat.append(_pad_2d(b.reshape(1, -1), 1, out_pad, jnp.float32))  # b  (f32)
        dims.append((in_pad, out_pad))
        in_pad = out_pad
    nout_pad = in_pad
    k_pad = _round_up(k)
    # Pre-transposed classifier weight: (nout_pad, k_pad), bf16.
    flat.append(_pad_2d(w_cls.T, nout_pad, k_pad, jnp.bfloat16))
    # Padded class columns get -1e30 bias -> exp underflows to 0 in log_softmax.
    b_cls_p = jnp.full((1, k_pad), -1e30, jnp.float32).at[0, :k].set(
        b_cls.astype(jnp.float32))
    flat.append(b_cls_p)

    return {"flat": tuple(flat), "dims": tuple(dims), "f_pad": f_pad,
            "k": k, "k_pad": k_pad, "num_gcn": len(gc)}


def prepare_adj(adj):
    """One-time persistent bf16 materialization of the normalized adjacency.
    Do this once per graph, NOT per forward (adj is the dominant HBM stream)."""
    return adj.astype(jnp.bfloat16)


# ---------------------------------------------------------------------------
# Forward pass: one fused pallas_call.
# ---------------------------------------------------------------------------
def gcn_linear_forward(prepared, x, adj_bf16):
    n, nfeat = x.shape
    f_pad = prepared["f_pad"]
    dims = prepared["dims"]
    num_gcn = prepared["num_gcn"]
    k = prepared["k"]
    k_pad = prepared["k_pad"]
    flat = prepared["flat"]

    # Lane-dense, bf16 node features (zero-padded feature columns).
    x_p = jnp.zeros((n, f_pad), jnp.bfloat16).at[:, :nfeat].set(
        x.astype(jnp.bfloat16))

    kernel = functools.partial(_fused_gcn_kernel, num_gcn=num_gcn, dims=dims)

    # Advisory cost estimate (padded dims; f32 accumulation on the MXU).
    flops = sum(2 * n * n * min(di, do) + 2 * n * di * do for (di, do) in dims)
    flops += 2 * n * dims[-1][1] * k_pad
    adj_bytes = int(adj_bf16.size) * 2
    param_bytes = sum(int(p.size) * p.dtype.itemsize for p in flat)
    bytes_accessed = (adj_bytes + int(x_p.size) * 2 + param_bytes + n * k_pad * 4)
    cost = pl.CostEstimate(flops=flops, transcendentals=n * (k_pad + 1),
                           bytes_accessed=bytes_accessed)

    # VMEM budget: adj + resident bf16 h/x + a few f32 temps + params + output,
    # with ~2x headroom; capped at 64 MiB so the same value is legal on v7x.
    max_dim = max([f_pad, k_pad] + [do for _, do in dims])
    resident = (adj_bytes + 2 * n * max_dim * 2          # bf16 h + x
                + 3 * n * max_dim * 4                    # f32 agg / hf / logits temps
                + param_bytes + n * k_pad * 4)           # params + output
    vmem_limit = int(min(max(resident * 2, 8 << 20), 64 << 20))

    vmem = pl.BlockSpec(memory_space=pltpu.MemorySpace.VMEM)
    out_pad = pl.pallas_call(
        kernel,
        out_shape=jax.ShapeDtypeStruct((n, k_pad), jnp.float32),
        in_specs=[vmem] * (2 + len(flat)),
        out_specs=vmem,
        cost_estimate=cost,
        compiler_params=pltpu.CompilerParams(vmem_limit_bytes=vmem_limit),
    )(adj_bf16, x_p, *flat)

    return out_pad[:, :k]   # drop padded class columns


# ---------------------------------------------------------------------------
# Pure-JAX reference mirroring the kernel's math (same bf16 quantization,
# same matmul association).
# ---------------------------------------------------------------------------
def gcn_linear_reference(params, x, adj):
    bf = jnp.bfloat16
    adj_q = adj.astype(bf)
    gc = [params["gcstart"], *params["gcn_middle"], params["gcend"]]
    h = x.astype(bf)
    for i, (w, b) in enumerate(gc):
        d_in, d_out = w.shape
        wq = w.astype(bf)
        if _round_up(d_out) >= _round_up(d_in):
            agg = jnp.dot(adj_q, h, preferred_element_type=jnp.float32)
            hf = jnp.dot(agg.astype(bf), wq, preferred_element_type=jnp.float32) + b
        else:
            sup = jnp.dot(h, wq, preferred_element_type=jnp.float32)
            hf = jnp.dot(adj_q, sup.astype(bf), preferred_element_type=jnp.float32) + b
        if i != len(gc) - 1:
            hf = jnp.maximum(hf, 0.0)
        h = hf.astype(bf)
    w_cls, b_cls = params["classifier"]
    logits = jnp.dot(h, w_cls.T.astype(bf),
                     preferred_element_type=jnp.float32) + b_cls
    return jax.nn.log_softmax(logits, axis=1)


# ---------------------------------------------------------------------------
# Main
# ---------------------------------------------------------------------------
if __name__ == "__main__":
    # Small, module-consistent shapes.
    N = 64        # number of graph nodes
    NFEAT = 16
    NHID = 32
    NOUT = 16
    NLAYERS = 3   # -> 1 middle layer
    K = 8
    DROPOUT = 0.5  # unused in inference

    key = jax.random.PRNGKey(0)
    kx, kadj, kparams = jax.random.split(key, 3)

    x = jax.random.normal(kx, (N, NFEAT), dtype=jnp.float32)

    # Symmetric, row-normalized dense adjacency (with self-loops).
    a = (jax.random.uniform(kadj, (N, N)) < 0.1).astype(jnp.float32)
    a = jnp.maximum(a, a.T) + jnp.eye(N, dtype=jnp.float32)
    adj = a / jnp.sum(a, axis=1, keepdims=True)

    params = init_gcn_linear_params(kparams, NFEAT, NHID, NOUT, NLAYERS, K)
    prepared = prepare_params(params, NFEAT)
    adj_bf16 = prepare_adj(adj)          # one-time persistent bf16 adjacency

    out = gcn_linear_forward(prepared, x, adj_bf16)
    out = jax.block_until_ready(out)

    assert out.shape == (N, K)
    # Rows of log_softmax should exponentiate-sum to ~1.
    assert jnp.allclose(jnp.sum(jnp.exp(out), axis=1), 1.0, atol=1e-4)

    # Validate against a pure-JAX reference using the same quantization/association.
    ref = gcn_linear_reference(params, x, adj)
    max_err = float(jnp.max(jnp.abs(out - ref)))
    assert jnp.allclose(out, ref, atol=5e-4, rtol=5e-4), f"max_err={max_err}"

    print("KERNEL_OK")
</pallas_src>

<mosaic_0001>
module attributes {stable_mosaic.version = 11 : i64} {
  func.func @_fused_gcn_kernel(%arg0: memref<64x64xbf16, #tpu.memory_space<vmem>>, %arg1: memref<64x128xbf16, #tpu.memory_space<vmem>>, %arg2: memref<128x128xbf16, #tpu.memory_space<vmem>>, %arg3: memref<1x128xf32, #tpu.memory_space<vmem>>, %arg4: memref<128x128xbf16, #tpu.memory_space<vmem>>, %arg5: memref<1x128xf32, #tpu.memory_space<vmem>>, %arg6: memref<128x128xbf16, #tpu.memory_space<vmem>>, %arg7: memref<1x128xf32, #tpu.memory_space<vmem>>, %arg8: memref<128x128xbf16, #tpu.memory_space<vmem>>, %arg9: memref<1x128xf32, #tpu.memory_space<vmem>>, %arg10: memref<64x128xf32, #tpu.memory_space<vmem>>) attributes {dimension_semantics = [], scalar_prefetch = 0 : i64, scratch_operands = 0 : i64, tpu.core_type = #tpu.core_type<tc>} {
    %c0 = arith.constant 0 : index
    %c0_0 = arith.constant 0 : index
    %0 = vector.load %arg0[%c0, %c0_0] : memref<64x64xbf16, #tpu.memory_space<vmem>>, vector<64x64xbf16>
    %c0_1 = arith.constant 0 : index
    %c0_2 = arith.constant 0 : index
    %1 = vector.load %arg1[%c0_1, %c0_2] : memref<64x128xbf16, #tpu.memory_space<vmem>>, vector<64x128xbf16>
    %c0_3 = arith.constant 0 : index
    %c0_4 = arith.constant 0 : index
    %2 = vector.load %arg2[%c0_3, %c0_4] : memref<128x128xbf16, #tpu.memory_space<vmem>>, vector<128x128xbf16>
    %c0_5 = arith.constant 0 : index
    %c0_6 = arith.constant 0 : index
    %3 = vector.load %arg3[%c0_5, %c0_6] : memref<1x128xf32, #tpu.memory_space<vmem>>, vector<1x128xf32>
    %cst = arith.constant dense<0.000000e+00> : vector<64x128xf32>
    %4 = tpu.matmul %0, %1, %cst {dimension_numbers = #tpu.dot_dimension_numbers<[1], [0], [0], [1], [0, 0, 1, 1], [], []>} : vector<64x64xbf16>, vector<64x128xbf16>, vector<64x128xf32> -> vector<64x128xf32>
    %5 = arith.truncf %4 : vector<64x128xf32> to vector<64x128xbf16>
    %cst_7 = arith.constant dense<0.000000e+00> : vector<64x128xf32>
    %6 = tpu.matmul %5, %2, %cst_7 {dimension_numbers = #tpu.dot_dimension_numbers<[1], [0], [0], [1], [0, 0, 1, 1], [], []>} : vector<64x128xbf16>, vector<128x128xbf16>, vector<64x128xf32> -> vector<64x128xf32>
    %7 = vector.broadcast %3 : vector<1x128xf32> to vector<64x128xf32>
    %8 = arith.addf %6, %7 : vector<64x128xf32>
    %cst_8 = arith.constant 0.000000e+00 : f32
    %9 = vector.broadcast %cst_8 : f32 to vector<64x128xf32>
    %10 = arith.maximumf %8, %9 : vector<64x128xf32>
    %11 = arith.truncf %10 : vector<64x128xf32> to vector<64x128xbf16>
    %c0_9 = arith.constant 0 : index
    %c0_10 = arith.constant 0 : index
    %12 = vector.load %arg4[%c0_9, %c0_10] : memref<128x128xbf16, #tpu.memory_space<vmem>>, vector<128x128xbf16>
    %c0_11 = arith.constant 0 : index
    %c0_12 = arith.constant 0 : index
    %13 = vector.load %arg5[%c0_11, %c0_12] : memref<1x128xf32, #tpu.memory_space<vmem>>, vector<1x128xf32>
    %cst_13 = arith.constant dense<0.000000e+00> : vector<64x128xf32>
    %14 = tpu.matmul %0, %11, %cst_13 {dimension_numbers = #tpu.dot_dimension_numbers<[1], [0], [0], [1], [0, 0, 1, 1], [], []>} : vector<64x64xbf16>, vector<64x128xbf16>, vector<64x128xf32> -> vector<64x128xf32>
    %15 = arith.truncf %14 : vector<64x128xf32> to vector<64x128xbf16>
    %cst_14 = arith.constant dense<0.000000e+00> : vector<64x128xf32>
    %16 = tpu.matmul %15, %12, %cst_14 {dimension_numbers = #tpu.dot_dimension_numbers<[1], [0], [0], [1], [0, 0, 1, 1], [], []>} : vector<64x128xbf16>, vector<128x128xbf16>, vector<64x128xf32> -> vector<64x128xf32>
    %17 = vector.broadcast %13 : vector<1x128xf32> to vector<64x128xf32>
    %18 = arith.addf %16, %17 : vector<64x128xf32>
    %cst_15 = arith.constant 0.000000e+00 : f32
    %19 = vector.broadcast %cst_15 : f32 to vector<64x128xf32>
    %20 = arith.maximumf %18, %19 : vector<64x128xf32>
    %21 = arith.truncf %20 : vector<64x128xf32> to vector<64x128xbf16>
    %c0_16 = arith.constant 0 : index
    %c0_17 = arith.constant 0 : index
    %22 = vector.load %arg6[%c0_16, %c0_17] : memref<128x128xbf16, #tpu.memory_space<vmem>>, vector<128x128xbf16>
    %c0_18 = arith.constant 0 : index
    %c0_19 = arith.constant 0 : index
    %23 = vector.load %arg7[%c0_18, %c0_19] : memref<1x128xf32, #tpu.memory_space<vmem>>, vector<1x128xf32>
    %cst_20 = arith.constant dense<0.000000e+00> : vector<64x128xf32>
    %24 = tpu.matmul %0, %21, %cst_20 {dimension_numbers = #tpu.dot_dimension_numbers<[1], [0], [0], [1], [0, 0, 1, 1], [], []>} : vector<64x64xbf16>, vector<64x128xbf16>, vector<64x128xf32> -> vector<64x128xf32>
    %25 = arith.truncf %24 : vector<64x128xf32> to vector<64x128xbf16>
    %cst_21 = arith.constant dense<0.000000e+00> : vector<64x128xf32>
    %26 = tpu.matmul %25, %22, %cst_21 {dimension_numbers = #tpu.dot_dimension_numbers<[1], [0], [0], [1], [0, 0, 1, 1], [], []>} : vector<64x128xbf16>, vector<128x128xbf16>, vector<64x128xf32> -> vector<64x128xf32>
    %27 = vector.broadcast %23 : vector<1x128xf32> to vector<64x128xf32>
    %28 = arith.addf %26, %27 : vector<64x128xf32>
    %29 = arith.truncf %28 : vector<64x128xf32> to vector<64x128xbf16>
    %c0_22 = arith.constant 0 : index
    %c0_23 = arith.constant 0 : index
    %30 = vector.load %arg8[%c0_22, %c0_23] : memref<128x128xbf16, #tpu.memory_space<vmem>>, vector<128x128xbf16>
    %c0_24 = arith.constant 0 : index
    %c0_25 = arith.constant 0 : index
    %31 = vector.load %arg9[%c0_24, %c0_25] : memref<1x128xf32, #tpu.memory_space<vmem>>, vector<1x128xf32>
    %cst_26 = arith.constant dense<0.000000e+00> : vector<64x128xf32>
    %32 = tpu.matmul %29, %30, %cst_26 {dimension_numbers = #tpu.dot_dimension_numbers<[1], [0], [0], [1], [0, 0, 1, 1], [], []>} : vector<64x128xbf16>, vector<128x128xbf16>, vector<64x128xf32> -> vector<64x128xf32>
    %33 = vector.broadcast %31 : vector<1x128xf32> to vector<64x128xf32>
    %34 = arith.addf %32, %33 : vector<64x128xf32>
    %cst_27 = arith.constant dense<0xFF800000> : vector<64xf32>
    %35 = vector.multi_reduction <maximumf>, %34, %cst_27 [1] : vector<64x128xf32> to vector<64xf32>
    %36 = vector.shape_cast %35 : vector<64xf32> to vector<64x1xf32>
    %37 = vector.broadcast %36 : vector<64x1xf32> to vector<64x128xf32>
    %38 = arith.subf %34, %37 : vector<64x128xf32>
    %39 = math.exp %38 : vector<64x128xf32>
    %cst_28 = arith.constant dense<0.000000e+00> : vector<64xf32>
    %40 = vector.multi_reduction <add>, %39, %cst_28 [1] : vector<64x128xf32> to vector<64xf32>
    %41 = vector.shape_cast %40 : vector<64xf32> to vector<64x1xf32>
    %42 = math.log %41 : vector<64x1xf32>
    %43 = vector.broadcast %42 : vector<64x1xf32> to vector<64x128xf32>
    %44 = arith.subf %38, %43 : vector<64x128xf32>
    %c0_29 = arith.constant 0 : index
    %c0_30 = arith.constant 0 : index
    %45 = vector.load %arg10[%c0_29, %c0_30] : memref<64x128xf32, #tpu.memory_space<vmem>>, vector<64x128xf32>
    tpu.vector_store %arg10[%c0_29, %c0_30], %44 {strides = array<i32>} : memref<64x128xf32, #tpu.memory_space<vmem>>, vector<64x128xf32>,
    return
  }
}

</mosaic_0001>

<llo_original>
// kernel: tpu_custom_call.1
$region0: #{tpu_custom_call.1}
  #allocation0 [shape = 'u32[]', space=smem, size = 0x4, offset = 0x4, fixed_abs, tag = 'smem constant byte address 0x4 - core index']
  #allocation1 [shape = 'u32[144,128]{1,0:T(1,128)}', space=vmem, size = 0x12000, scoped, tag = 'internal scratch']
  %s0 = inlined_call_operand.hbm [shape: bf16[64,64], index: 0, kind: input, shape index: {}]
  %s1 = inlined_call_operand.hbm [shape: bf16[64,128], index: 1, kind: input, shape index: {}]
  %s2 = inlined_call_operand.hbm [shape: bf16[128,128], index: 2, kind: input, shape index: {}]
  %s3 = inlined_call_operand.vmem [shape: f32[1,128], index: 3, kind: input, shape index: {}]
  %s4 = inlined_call_operand.hbm [shape: bf16[128,128], index: 4, kind: input, shape index: {}]
  %s5 = inlined_call_operand.vmem [shape: f32[1,128], index: 5, kind: input, shape index: {}]
  %s6 = inlined_call_operand.hbm [shape: bf16[128,128], index: 6, kind: input, shape index: {}]
  %s7 = inlined_call_operand.vmem [shape: f32[1,128], index: 7, kind: input, shape index: {}]
  %s8 = inlined_call_operand.hbm [shape: bf16[128,128], index: 8, kind: input, shape index: {}]
  %s9 = inlined_call_operand.vmem [shape: f32[1,128], index: 9, kind: input, shape index: {}]
  %s10 = inlined_call_operand.hbm [shape: f32[64,128], index: 10, kind: output, shape index: {}]
  %s11 = sld [smem:[#allocation0]]
  $region74: #{tpu_custom_call.1} parent=0
    _
  %s13 = ssub.s32 1, %s11
  %s14 = scalar_select 0, %s13, %s11
  $region1: #{tpu_custom_call.1} parent=0
    #allocation2 [shape = 'u8[16384]{0}', space=vmem, size = 0x4000, scoped, tag = 'input window, operand 0, single buffered']
    #allocation3 [shape = 's32[1]{0}', space=sflag, size = 0x4, scoped, tag = 'scoped memory for tpu_custom_call.1']
    #allocation4 [shape = 's32[1]{0}', space=sflag, size = 0x4, scoped, tag = 'scoped memory for tpu_custom_call.1']
    #allocation5 [shape = 'u8[16384]{0}', space=vmem, size = 0x4000, scoped, tag = 'input window, operand 1, single buffered']
    #allocation6 [shape = 's32[1]{0}', space=sflag, size = 0x4, scoped, tag = 'scoped memory for tpu_custom_call.1']
    #allocation7 [shape = 'u8[32768]{0}', space=vmem, size = 0x8000, scoped, tag = 'input window, operand 2, single buffered']
    #allocation8 [shape = 'u8[32768]{0}', space=vmem, size = 0x8000, scoped, tag = 'input window, operand 4, single buffered']
    #allocation9 [shape = 's32[1]{0}', space=sflag, size = 0x4, scoped, tag = 'scoped memory for tpu_custom_call.1']
    #allocation10 [shape = 'u8[32768]{0}', space=vmem, size = 0x8000, scoped, tag = 'input window, operand 6, single buffered']
    #allocation11 [shape = 'u8[32768]{0}', space=vmem, size = 0x8000, scoped, tag = 'input window, operand 8, single buffered']
    #allocation12 [shape = 's32[1]{0}', space=sflag, size = 0x4, scoped, tag = 'scoped memory for tpu_custom_call.1']
    #allocation13 [shape = 'u8[32768]{0}', space=vmem, size = 0x8000, scoped, tag = 'output window, operand 0, single buffered']
    %15 = vsyncpa [#allocation3], 0
    %16 = vsyncpa [#allocation6], 0
    %17 = vsyncpa [#allocation9], 0
    %18 = vsyncpa [#allocation12], 0
    %19 = vsyncpa [#allocation4], 0
    // Predicated region
    $region2: #{tpu_custom_call.1} parent=1 // pred_check
      _
    $region3: #{tpu_custom_call.1} parent=1 // pred_check_branch
      %21 = sbr.rel (0) target = $region5
    $region4: #{tpu_custom_call.1} parent=1 // pred_region
      %s23 = ssub.s32 512, 512
      %24 = vsyncadd [#allocation3], %s23
      %s25 = sshll.u32 [#allocation2], 4
      %s26 = int_to_ptr.vmem [resolvable:$true] %s25
      %31 = dma.hbm_to_vmem [thread:$0]  %s0, 512, %s26, [#allocation3], 64, 64, 4
    $region5: #{tpu_custom_call.1} parent=1 // pred_fallthru
      _
    // Predicated region
    $region6: #{tpu_custom_call.1} parent=1 // pred_check
      _
    $region7: #{tpu_custom_call.1} parent=1 // pred_check_branch
      %33 = sbr.rel (0) target = $region9
    $region8: #{tpu_custom_call.1} parent=1 // pred_region
      %s35 = ssub.s32 512, 512
      %36 = vsyncadd [#allocation6], %s35
      %s37 = sshll.u32 [#allocation5], 4
      %s38 = int_to_ptr.vmem [resolvable:$true] %s37
      %43 = dma.hbm_to_vmem [thread:$0]  %s1, 512, %s38, [#allocation6], 64, 64, 4
    $region9: #{tpu_custom_call.1} parent=1 // pred_fallthru
      _
    // Predicated region
    $region10: #{tpu_custom_call.1} parent=1 // pred_check
      _
    $region11: #{tpu_custom_call.1} parent=1 // pred_check_branch
      %45 = sbr.rel (0) target = $region13
    $region12: #{tpu_custom_call.1} parent=1 // pred_region
      %s47 = ssub.s32 1024, 1024
      %48 = vsyncadd [#allocation6], %s47
      %s49 = sshll.u32 [#allocation7], 4
      %s50 = int_to_ptr.vmem [resolvable:$true] %s49
      %55 = dma.hbm_to_vmem [thread:$0]  %s2, 1024, %s50, [#allocation6], 64, 64, 4
    $region13: #{tpu_custom_call.1} parent=1 // pred_fallthru
      _
    // Predicated region
    $region14: #{tpu_custom_call.1} parent=1 // pred_check
      _
    $region15: #{tpu_custom_call.1} parent=1 // pred_check_branch
      %57 = sbr.rel (0) target = $region17
    $region16: #{tpu_custom_call.1} parent=1 // pred_region
      _
    $region17: #{tpu_custom_call.1} parent=1 // pred_fallthru
      _
    // Predicated region
    $region18: #{tpu_custom_call.1} parent=1 // pred_check
      _
    $region19: #{tpu_custom_call.1} parent=1 // pred_check_branch
      %59 = sbr.rel (0) target = $region21
    $region20: #{tpu_custom_call.1} parent=1 // pred_region
      %s61 = ssub.s32 1024, 1024
      %62 = vsyncadd [#allocation9], %s61
      %s63 = sshll.u32 [#allocation8], 4
      %s64 = int_to_ptr.vmem [resolvable:$true] %s63
      %69 = dma.hbm_to_vmem [thread:$0]  %s4, 1024, %s64, [#allocation9], 64, 64, 4
    $region21: #{tpu_custom_call.1} parent=1 // pred_fallthru
      _
    // Predicated region
    $region22: #{tpu_custom_call.1} parent=1 // pred_check
      _
    $region23: #{tpu_custom_call.1} parent=1 // pred_check_branch
      %71 = sbr.rel (0) target = $region25
    $region24: #{tpu_custom_call.1} parent=1 // pred_region
      _
    $region25: #{tpu_custom_call.1} parent=1 // pred_fallthru
      _
    // Predicated region
    $region26: #{tpu_custom_call.1} parent=1 // pred_check
      _
    $region27: #{tpu_custom_call.1} parent=1 // pred_check_branch
      %73 = sbr.rel (0) target = $region29
    $region28: #{tpu_custom_call.1} parent=1 // pred_region
      %s75 = ssub.s32 1024, 1024
      %76 = vsyncadd [#allocation9], %s75
      %s77 = sshll.u32 [#allocation10], 4
      %s78 = int_to_ptr.vmem [resolvable:$true] %s77
      %83 = dma.hbm_to_vmem [thread:$0]  %s6, 1024, %s78, [#allocation9], 64, 64, 4
    $region29: #{tpu_custom_call.1} parent=1 // pred_fallthru
      _
    // Predicated region
    $region30: #{tpu_custom_call.1} parent=1 // pred_check
      _
    $region31: #{tpu_custom_call.1} parent=1 // pred_check_branch
      %85 = sbr.rel (0) target = $region33
    $region32: #{tpu_custom_call.1} parent=1 // pred_region
      _
    $region33: #{tpu_custom_call.1} parent=1 // pred_fallthru
      _
    // Predicated region
    $region34: #{tpu_custom_call.1} parent=1 // pred_check
      _
    $region35: #{tpu_custom_call.1} parent=1 // pred_check_branch
      %87 = sbr.rel (0) target = $region37
    $region36: #{tpu_custom_call.1} parent=1 // pred_region
      %s89 = ssub.s32 1024, 1024
      %90 = vsyncadd [#allocation12], %s89
      %s91 = sshll.u32 [#allocation11], 4
      %s92 = int_to_ptr.vmem [resolvable:$true] %s91
      %97 = dma.hbm_to_vmem [thread:$0]  %s8, 1024, %s92, [#allocation12], 64, 64, 4
    $region37: #{tpu_custom_call.1} parent=1 // pred_fallthru
      _
    // Predicated region
    $region38: #{tpu_custom_call.1} parent=1 // pred_check
      _
    $region39: #{tpu_custom_call.1} parent=1 // pred_check_branch
      %99 = sbr.rel (0) target = $region41
    $region40: #{tpu_custom_call.1} parent=1 // pred_region
      _
    $region41: #{tpu_custom_call.1} parent=1 // pred_fallthru
      _
    // Predicated region
    $region42: #{tpu_custom_call.1} parent=1 // pred_check
      _
    $region43: #{tpu_custom_call.1} parent=1 // pred_check_branch
      %101 = sbr.rel (0) target = $region45
    $region44: #{tpu_custom_call.1} parent=1 // pred_region
      %102 = dma.done [#allocation3], 512
    $region45: #{tpu_custom_call.1} parent=1 // pred_fallthru
      _
    // Predicated region
    $region46: #{tpu_custom_call.1} parent=1 // pred_check
      _
    $region47: #{tpu_custom_call.1} parent=1 // pred_check_branch
      %104 = sbr.rel (0) target = $region49
    $region48: #{tpu_custom_call.1} parent=1 // pred_region
      %105 = dma.done [#allocation6], 512
    $region49: #{tpu_custom_call.1} parent=1 // pred_fallthru
      _
    // Predicated region
    $region50: #{tpu_custom_call.1} parent=1 // pred_check
      _
    $region51: #{tpu_custom_call.1} parent=1 // pred_check_branch
      %107 = sbr.rel (0) target = $region53
    $region52: #{tpu_custom_call.1} parent=1 // pred_region
      %108 = dma.done [#allocation6], 1024
    $region53: #{tpu_custom_call.1} parent=1 // pred_fallthru
      _
    // Predicated region
    $region54: #{tpu_custom_call.1} parent=1 // pred_check
      _
    $region55: #{tpu_custom_call.1} parent=1 // pred_check_branch
      %110 = sbr.rel (0) target = $region57
    $region56: #{tpu_custom_call.1} parent=1 // pred_region
      %111 = dma.done [#allocation9], 1024
    $region57: #{tpu_custom_call.1} parent=1 // pred_fallthru
      _
    // Predicated region
    $region58: #{tpu_custom_call.1} parent=1 // pred_check
      _
    $region59: #{tpu_custom_call.1} parent=1 // pred_check_branch
      %113 = sbr.rel (0) target = $region61
    $region60: #{tpu_custom_call.1} parent=1 // pred_region
      %114 = dma.done [#allocation9], 1024
    $region61: #{tpu_custom_call.1} parent=1 // pred_fallthru
      _
    // Predicated region
    $region62: #{tpu_custom_call.1} parent=1 // pred_check
      _
    $region63: #{tpu_custom_call.1} parent=1 // pred_check_branch
      %116 = sbr.rel (0) target = $region65
    $region64: #{tpu_custom_call.1} parent=1 // pred_region
      %117 = dma.done [#allocation12], 1024
    $region65: #{tpu_custom_call.1} parent=1 // pred_fallthru
      _
    %v119 = vld [vmem:[#allocation2] sm:$0xf]
    %v120 = vld [vmem:[#allocation2 + $0x4] sm:$0xf]
    %v121 = vld [vmem:[#allocation2 + $0x8] sm:$0xf]
    %v122 = vld [vmem:[#allocation2 + $0xc] sm:$0xf]
    %v123 = vld [vmem:[#allocation2 + $0x10] sm:$0xf]
    %v124 = vld [vmem:[#allocation2 + $0x14] sm:$0xf]
    %v125 = vld [vmem:[#allocation2 + $0x18] sm:$0xf]
    %v126 = vld [vmem:[#allocation2 + $0x1c] sm:$0xf]
    %v127 = vld [vmem:[#allocation5] sm:$0xf]
    %v128 = vld [vmem:[#allocation5 + $0x4] sm:$0xf]
    %v129 = vld [vmem:[#allocation5 + $0x8] sm:$0xf]
    %v130 = vld [vmem:[#allocation5 + $0xc] sm:$0xf]
    %v131 = vld [vmem:[#allocation5 + $0x10] sm:$0xf]
    %v132 = vld [vmem:[#allocation5 + $0x14] sm:$0xf]
    %v133 = vld [vmem:[#allocation5 + $0x18] sm:$0xf]
    %v134 = vld [vmem:[#allocation5 + $0x1c] sm:$0xf]
    %v135 = vld [vmem:[#allocation7] sm:$0xf]
    %v136 = vld [vmem:[#allocation7 + $0x4] sm:$0xf]
    %v137 = vld [vmem:[#allocation7 + $0x8] sm:$0xf]
    %v138 = vld [vmem:[#allocation7 + $0xc] sm:$0xf]
    %v139 = vld [vmem:[#allocation7 + $0x10] sm:$0xf]
    %v140 = vld [vmem:[#allocation7 + $0x14] sm:$0xf]
    %v141 = vld [vmem:[#allocation7 + $0x18] sm:$0xf]
    %v142 = vld [vmem:[#allocation7 + $0x1c] sm:$0xf]
    %v143 = vld [vmem:[#allocation7 + $0x20] sm:$0xf]
    %v144 = vld [vmem:[#allocation7 + $0x24] sm:$0xf]
    %v145 = vld [vmem:[#allocation7 + $0x28] sm:$0xf]
    %v146 = vld [vmem:[#allocation7 + $0x2c] sm:$0xf]
    %v147 = vld [vmem:[#allocation7 + $0x30] sm:$0xf]
    %v148 = vld [vmem:[#allocation7 + $0x34] sm:$0xf]
    %v149 = vld [vmem:[#allocation7 + $0x38] sm:$0xf]
    %v150 = vld [vmem:[#allocation7 + $0x3c] sm:$0xf]
    %v151 = vld [vmem:[%s3] sm:$0x1]
    %v160 = vunpack.c.l.b16 %v119
    %v161 = vunpack.c.l.b16 %v120
    %v162 = vunpack.c.l.b16 %v121
    %v163 = vunpack.c.l.b16 %v122
    %v164 = vunpack.c.l.b16 %v123
    %v165 = vunpack.c.l.b16 %v124
    %v166 = vunpack.c.l.b16 %v125
    %v167 = vunpack.c.l.b16 %v126
    %v168 = vpack.c.b16 %v161, %v160
    %v169 = vpack.c.b16 %v163, %v162
    %v170 = vpack.c.b16 %v165, %v164
    %v171 = vpack.c.b16 %v167, %v166
    %v180 = vunpack.c.l.b16 %v127
    %v181 = vunpack.c.l.b16 %v128
    %v182 = vunpack.c.l.b16 %v129
    %v183 = vunpack.c.l.b16 %v130
    %v184 = vunpack.c.l.b16 %v131
    %v185 = vunpack.c.l.b16 %v132
    %v186 = vunpack.c.l.b16 %v133
    %v187 = vunpack.c.l.b16 %v134
    %v188 = vpack.c.b16 %v181, %v180
    %v189 = vpack.c.b16 %v183, %v182
    %v190 = vpack.c.b16 %v185, %v184
    %v191 = vpack.c.b16 %v187, %v186
    %vm196 = vcmask 523264
    %v198 = vsel %vm196, %v168, 0
    %v201 = vsel %vm196, %v169, 0
    %v204 = vsel %vm196, %v170, 0
    %v207 = vsel %vm196, %v171, 0
    %209 = vmatprep.subr.bf16.mxu0 0
    %210 = vmatpush1.bf16.msra.mxu0 0
    %211 = vmatprep.subr.bf16.mxu0 0
    %212 = vmatpush1.bf16.msra.mxu0 0
    %213 = vmatprep.subr.bf16.mxu0 0
    %214 = vmatpush1.bf16.msra.mxu0 0
    %215 = vmatprep.subr.bf16.mxu0 0
    %216 = vmatpush1.bf16.msra.mxu0 0
    %217 = vmatprep.subr.bf16.mxu0 0
    %218 = vmatpush1.bf16.msra.mxu0 %v191
    %219 = vmatprep.subr.bf16.mxu0 0
    %220 = vmatpush1.bf16.msra.mxu0 %v190
    %221 = vmatprep.subr.bf16.mxu0 0
    %222 = vmatpush1.bf16.msra.mxu0 %v189
    %223 = vmatprep.subr.bf16.mxu0 0
    %224 = vmatpush1.bf16.msra.mxu0 %v188
    %225 = vmatprep.subr.bf16.mxu0 0
    %226 = vmatpush2.bf16.msra.mxu0 0
    %227 = vmatprep.subr.bf16.mxu0 0
    %228 = vmatpush2.bf16.msra.mxu0 0
    %229 = vmatprep.subr.bf16.mxu0 0
    %230 = vmatpush2.bf16.msra.mxu0 0
    %231 = vmatprep.subr.bf16.mxu0 0
    %232 = vmatpush2.bf16.msra.mxu0 0
    %233 = vmatprep.subr.bf16.mxu0 0
    %234 = vmatpush2.bf16.msra.mxu0 0
    %235 = vmatprep.subr.bf16.mxu0 0
    %236 = vmatpush2.bf16.msra.mxu0 0
    %237 = vmatprep.subr.bf16.mxu0 0
    %238 = vmatpush2.bf16.msra.mxu0 0
    %239 = vmatprep.subr.bf16.mxu0 0
    %240 = vmatpush2.bf16.msra.mxu0 0
    %241 = vmatprep.mubr.bf16.mxu0 0
    %242 = vmatmul.mubr.bf16.gmra.mxu0 %v198
    %v243 = vpop.f32.mrf.mxu0
    %v244 = vadd.f32 0.0, %v243
    %v245 = vpop.f32.mrf.mxu0
    %v246 = vpop.f32.mrf.mxu0
    %v247 = vadd.f32 0.0, %v246
    %v248 = vpop.f32.mrf.mxu0
    %249 = vmatprep.mubr.bf16.mxu0 0
    %250 = vmatmul.mubr.bf16.gmra.mxu0 %v201
    %v251 = vpop.f32.mrf.mxu0
    %v252 = vadd.f32 0.0, %v251
    %v253 = vpop.f32.mrf.mxu0
    %v254 = vpop.f32.mrf.mxu0
    %v255 = vadd.f32 0.0, %v254
    %v256 = vpop.f32.mrf.mxu0
    %257 = vmatprep.mubr.bf16.mxu0 0
    %258 = vmatmul.mubr.bf16.gmra.mxu0 %v204
    %v259 = vpop.f32.mrf.mxu0
    %v260 = vadd.f32 0.0, %v259
    %v261 = vpop.f32.mrf.mxu0
    %v262 = vpop.f32.mrf.mxu0
    %v263 = vadd.f32 0.0, %v262
    %v264 = vpop.f32.mrf.mxu0
    %265 = vmatprep.mubr.bf16.mxu0 0
    %266 = vmatmul.mubr.bf16.gmra.mxu0 %v207
    %v267 = vpop.f32.mrf.mxu0
    %v268 = vadd.f32 0.0, %v267
    %v269 = vpop.f32.mrf.mxu0
    %v270 = vpop.f32.mrf.mxu0
    %v271 = vadd.f32 0.0, %v270
    %v272 = vpop.f32.mrf.mxu0
    %273 = vdwg.mxu0
    %v274 = vpack.c.bf16 %v247, %v244
    %v275 = vpack.c.bf16 %v255, %v252
    %v276 = vpack.c.bf16 %v263, %v260
    %v277 = vpack.c.bf16 %v271, %v268
    %v279 = vlaneseq
    %v280 = vshrl.u32 %v279, 7
    %v281 = vsub.s32 0, %v280
    %v282 = vrot.slane %v151, %v281
    %v300 = vunpack.c.l.b16 %v135
    %v301 = vunpack.c.l.b16 %v136
    %v302 = vunpack.c.l.b16 %v137
    %v303 = vunpack.c.l.b16 %v138
    %v304 = vunpack.c.l.b16 %v139
    %v305 = vunpack.c.l.b16 %v140
    %v306 = vunpack.c.l.b16 %v141
    %v307 = vunpack.c.l.b16 %v142
    %v308 = vunpack.c.l.b16 %v143
    %v309 = vunpack.c.l.b16 %v144
    %v310 = vunpack.c.l.b16 %v145
    %v311 = vunpack.c.l.b16 %v146
    %v312 = vunpack.c.l.b16 %v147
    %v313 = vunpack.c.l.b16 %v148
    %v314 = vunpack.c.l.b16 %v149
    %v315 = vunpack.c.l.b16 %v150
    %v316 = vpack.c.b16 %v301, %v300
    %v317 = vpack.c.b16 %v303, %v302
    %v318 = vpack.c.b16 %v305, %v304
    %v319 = vpack.c.b16 %v307, %v306
    %v320 = vpack.c.b16 %v309, %v308
    %v321 = vpack.c.b16 %v311, %v310
    %v322 = vpack.c.b16 %v313, %v312
    %v323 = vpack.c.b16 %v315, %v314
    %332 = vmatprep.subr.bf16.mxu0 0
    %333 = vmatpush1.bf16.msra.mxu0 %v323
    %334 = vmatprep.subr.bf16.mxu0 0
    %335 = vmatpush1.bf16.msra.mxu0 %v322
    %336 = vmatprep.subr.bf16.mxu0 0
    %337 = vmatpush1.bf16.msra.mxu0 %v321
    %338 = vmatprep.subr.bf16.mxu0 0
    %339 = vmatpush1.bf16.msra.mxu0 %v320
    %340 = vmatprep.subr.bf16.mxu0 0
    %341 = vmatpush1.bf16.msra.mxu0 %v319
    %342 = vmatprep.subr.bf16.mxu0 0
    %343 = vmatpush1.bf16.msra.mxu0 %v318
    %344 = vmatprep.subr.bf16.mxu0 0
    %345 = vmatpush1.bf16.msra.mxu0 %v317
    %346 = vmatprep.subr.bf16.mxu0 0
    %347 = vmatpush1.bf16.msra.mxu0 %v316
    %348 = vmatprep.subr.bf16.mxu0 0
    %349 = vmatpush2.bf16.msra.mxu0 0
    %350 = vmatprep.subr.bf16.mxu0 0
    %351 = vmatpush2.bf16.msra.mxu0 0
    %352 = vmatprep.subr.bf16.mxu0 0
    %353 = vmatpush2.bf16.msra.mxu0 0
    %354 = vmatprep.subr.bf16.mxu0 0
    %355 = vmatpush2.bf16.msra.mxu0 0
    %356 = vmatprep.subr.bf16.mxu0 0
    %357 = vmatpush2.bf16.msra.mxu0 0
    %358 = vmatprep.subr.bf16.mxu0 0
    %359 = vmatpush2.bf16.msra.mxu0 0
    %360 = vmatprep.subr.bf16.mxu0 0
    %361 = vmatpush2.bf16.msra.mxu0 0
    %362 = vmatprep.subr.bf16.mxu0 0
    %363 = vmatpush2.bf16.msra.mxu0 0
    %364 = vmatprep.mubr.bf16.mxu0 0
    %365 = vmatmul.mubr.bf16.gmra.mxu0 %v274
    %v366 = vpop.f32.mrf.mxu0
    %v367 = vadd.f32 %v282, %v366
    %v368 = vpop.f32.mrf.mxu0
    %v369 = vpop.f32.mrf.mxu0
    %v370 = vadd.f32 %v282, %v369
    %v371 = vpop.f32.mrf.mxu0
    %372 = vmatprep.mubr.bf16.mxu0 0
    %373 = vmatmul.mubr.bf16.gmra.mxu0 %v275
    %v374 = vpop.f32.mrf.mxu0
    %v375 = vadd.f32 %v282, %v374
    %v376 = vpop.f32.mrf.mxu0
    %v377 = vpop.f32.mrf.mxu0
    %v378 = vadd.f32 %v282, %v377
    %v379 = vpop.f32.mrf.mxu0
    %380 = vmatprep.mubr.bf16.mxu0 0
    %381 = vmatmul.mubr.bf16.gmra.mxu0 %v276
    %v382 = vpop.f32.mrf.mxu0
    %v383 = vadd.f32 %v282, %v382
    %v384 = vpop.f32.mrf.mxu0
    %v385 = vpop.f32.mrf.mxu0
    %v386 = vadd.f32 %v282, %v385
    %v387 = vpop.f32.mrf.mxu0
    %388 = vmatprep.mubr.bf16.mxu0 0
    %389 = vmatmul.mubr.bf16.gmra.mxu0 %v277
    %v390 = vpop.f32.mrf.mxu0
    %v391 = vadd.f32 %v282, %v390
    %v392 = vpop.f32.mrf.mxu0
    %v393 = vpop.f32.mrf.mxu0
    %v394 = vadd.f32 %v282, %v393
    %v395 = vpop.f32.mrf.mxu0
    %396 = vdwg.mxu0
    %v397 = vmax.f32 %v367, 0.0
    %v398 = vmax.f32 %v370, 0.0
    %v399 = vmax.f32 %v375, 0.0
    %v400 = vmax.f32 %v378, 0.0
    %v401 = vmax.f32 %v383, 0.0
    %v402 = vmax.f32 %v386, 0.0
    %v403 = vmax.f32 %v391, 0.0
    %v404 = vmax.f32 %v394, 0.0
    %v405 = vpack.c.bf16 %v398, %v397
    %v406 = vpack.c.bf16 %v400, %v399
    %v407 = vpack.c.bf16 %v402, %v401
    %v408 = vpack.c.bf16 %v404, %v403
    %v409 = vld [vmem:[#allocation8] sm:$0xf]
    %v410 = vld [vmem:[#allocation8 + $0x4] sm:$0xf]
    %v411 = vld [vmem:[#allocation8 + $0x8] sm:$0xf]
    %v412 = vld [vmem:[#allocation8 + $0xc] sm:$0xf]
    %v413 = vld [vmem:[#allocation8 + $0x10] sm:$0xf]
    %v414 = vld [vmem:[#allocation8 + $0x14] sm:$0xf]
    %v415 = vld [vmem:[#allocation8 + $0x18] sm:$0xf]
    %v416 = vld [vmem:[#allocation8 + $0x1c] sm:$0xf]
    %v417 = vld [vmem:[#allocation8 + $0x20] sm:$0xf]
    %v418 = vld [vmem:[#allocation8 + $0x24] sm:$0xf]
    %v419 = vld [vmem:[#allocation8 + $0x28] sm:$0xf]
    %v420 = vld [vmem:[#allocation8 + $0x2c] sm:$0xf]
    %v421 = vld [vmem:[#allocation8 + $0x30] sm:$0xf]
    %v422 = vld [vmem:[#allocation8 + $0x34] sm:$0xf]
    %v423 = vld [vmem:[#allocation8 + $0x38] sm:$0xf]
    %v424 = vld [vmem:[#allocation8 + $0x3c] sm:$0xf]
    %v425 = vld [vmem:[%s5] sm:$0x1]
    %426 = vmatprep.subr.bf16.mxu0 0
    %427 = vmatpush1.bf16.msra.mxu0 0
    %428 = vmatprep.subr.bf16.mxu0 0
    %429 = vmatpush1.bf16.msra.mxu0 0
    %430 = vmatprep.subr.bf16.mxu0 0
    %431 = vmatpush1.bf16.msra.mxu0 0
    %432 = vmatprep.subr.bf16.mxu0 0
    %433 = vmatpush1.bf16.msra.mxu0 0
    %434 = vmatprep.subr.bf16.mxu0 0
    %435 = vmatpush1.bf16.msra.mxu0 %v408
    %436 = vmatprep.subr.bf16.mxu0 0
    %437 = vmatpush1.bf16.msra.mxu0 %v407
    %438 = vmatprep.subr.bf16.mxu0 0
    %439 = vmatpush1.bf16.msra.mxu0 %v406
    %440 = vmatprep.subr.bf16.mxu0 0
    %441 = vmatpush1.bf16.msra.mxu0 %v405
    %442 = vmatprep.subr.bf16.mxu0 0
    %443 = vmatpush2.bf16.msra.mxu0 0
    %444 = vmatprep.subr.bf16.mxu0 0
    %445 = vmatpush2.bf16.msra.mxu0 0
    %446 = vmatprep.subr.bf16.mxu0 0
    %447 = vmatpush2.bf16.msra.mxu0 0
    %448 = vmatprep.subr.bf16.mxu0 0
    %449 = vmatpush2.bf16.msra.mxu0 0
    %450 = vmatprep.subr.bf16.mxu0 0
    %451 = vmatpush2.bf16.msra.mxu0 0
    %452 = vmatprep.subr.bf16.mxu0 0
    %453 = vmatpush2.bf16.msra.mxu0 0
    %454 = vmatprep.subr.bf16.mxu0 0
    %455 = vmatpush2.bf16.msra.mxu0 0
    %456 = vmatprep.subr.bf16.mxu0 0
    %457 = vmatpush2.bf16.msra.mxu0 0
    %458 = vmatprep.mubr.bf16.mxu0 0
    %459 = vmatmul.mubr.bf16.gmra.mxu0 %v198
    %v460 = vpop.f32.mrf.mxu0
    %v461 = vadd.f32 0.0, %v460
    %v462 = vpop.f32.mrf.mxu0
    %v463 = vpop.f32.mrf.mxu0
    %v464 = vadd.f32 0.0, %v463
    %v465 = vpop.f32.mrf.mxu0
    %466 = vmatprep.mubr.bf16.mxu0 0
    %467 = vmatmul.mubr.bf16.gmra.mxu0 %v201
    %v468 = vpop.f32.mrf.mxu0
    %v469 = vadd.f32 0.0, %v468
    %v470 = vpop.f32.mrf.mxu0
    %v471 = vpop.f32.mrf.mxu0
    %v472 = vadd.f32 0.0, %v471
    %v473 = vpop.f32.mrf.mxu0
    %474 = vmatprep.mubr.bf16.mxu0 0
    %475 = vmatmul.mubr.bf16.gmra.mxu0 %v204
    %v476 = vpop.f32.mrf.mxu0
    %v477 = vadd.f32 0.0, %v476
    %v478 = vpop.f32.mrf.mxu0
    %v479 = vpop.f32.mrf.mxu0
    %v480 = vadd.f32 0.0, %v479
    %v481 = vpop.f32.mrf.mxu0
    %482 = vmatprep.mubr.bf16.mxu0 0
    %483 = vmatmul.mubr.bf16.gmra.mxu0 %v207
    %v484 = vpop.f32.mrf.mxu0
    %v485 = vadd.f32 0.0, %v484
    %v486 = vpop.f32.mrf.mxu0
    %v487 = vpop.f32.mrf.mxu0
    %v488 = vadd.f32 0.0, %v487
    %v489 = vpop.f32.mrf.mxu0
    %490 = vdwg.mxu0
    %v491 = vpack.c.bf16 %v464, %v461
    %v492 = vpack.c.bf16 %v472, %v469
    %v493 = vpack.c.bf16 %v480, %v477
    %v494 = vpack.c.bf16 %v488, %v485
    %v496 = vlaneseq
    %v497 = vshrl.u32 %v496, 7
    %v498 = vsub.s32 0, %v497
    %v499 = vrot.slane %v425, %v498
    %v517 = vunpack.c.l.b16 %v409
    %v518 = vunpack.c.l.b16 %v410
    %v519 = vunpack.c.l.b16 %v411
    %v520 = vunpack.c.l.b16 %v412
    %v521 = vunpack.c.l.b16 %v413
    %v522 = vunpack.c.l.b16 %v414
    %v523 = vunpack.c.l.b16 %v415
    %v524 = vunpack.c.l.b16 %v416
    %v525 = vunpack.c.l.b16 %v417
    %v526 = vunpack.c.l.b16 %v418
    %v527 = vunpack.c.l.b16 %v419
    %v528 = vunpack.c.l.b16 %v420
    %v529 = vunpack.c.l.b16 %v421
    %v530 = vunpack.c.l.b16 %v422
    %v531 = vunpack.c.l.b16 %v423
    %v532 = vunpack.c.l.b16 %v424
    %v533 = vpack.c.b16 %v518, %v517
    %v534 = vpack.c.b16 %v520, %v519
    %v535 = vpack.c.b16 %v522, %v521
    %v536 = vpack.c.b16 %v524, %v523
    %v537 = vpack.c.b16 %v526, %v525
    %v538 = vpack.c.b16 %v528, %v527
    %v539 = vpack.c.b16 %v530, %v529
    %v540 = vpack.c.b16 %v532, %v531
    %549 = vmatprep.subr.bf16.mxu0 0
    %550 = vmatpush1.bf16.msra.mxu0 %v540
    %551 = vmatprep.subr.bf16.mxu0 0
    %552 = vmatpush1.bf16.msra.mxu0 %v539
    %553 = vmatprep.subr.bf16.mxu0 0
    %554 = vmatpush1.bf16.msra.mxu0 %v538
    %555 = vmatprep.subr.bf16.mxu0 0
    %556 = vmatpush1.bf16.msra.mxu0 %v537
    %557 = vmatprep.subr.bf16.mxu0 0
    %558 = vmatpush1.bf16.msra.mxu0 %v536
    %559 = vmatprep.subr.bf16.mxu0 0
    %560 = vmatpush1.bf16.msra.mxu0 %v535
    %561 = vmatprep.subr.bf16.mxu0 0
    %562 = vmatpush1.bf16.msra.mxu0 %v534
    %563 = vmatprep.subr.bf16.mxu0 0
    %564 = vmatpush1.bf16.msra.mxu0 %v533
    %565 = vmatprep.subr.bf16.mxu0 0
    %566 = vmatpush2.bf16.msra.mxu0 0
    %567 = vmatprep.subr.bf16.mxu0 0
    %568 = vmatpush2.bf16.msra.mxu0 0
    %569 = vmatprep.subr.bf16.mxu0 0
    %570 = vmatpush2.bf16.msra.mxu0 0
    %571 = vmatprep.subr.bf16.mxu0 0
    %572 = vmatpush2.bf16.msra.mxu0 0
    %573 = vmatprep.subr.bf16.mxu0 0
    %574 = vmatpush2.bf16.msra.mxu0 0
    %575 = vmatprep.subr.bf16.mxu0 0
    %576 = vmatpush2.bf16.msra.mxu0 0
    %577 = vmatprep.subr.bf16.mxu0 0
    %578 = vmatpush2.bf16.msra.mxu0 0
    %579 = vmatprep.subr.bf16.mxu0 0
    %580 = vmatpush2.bf16.msra.mxu0 0
    %581 = vmatprep.mubr.bf16.mxu0 0
    %582 = vmatmul.mubr.bf16.gmra.mxu0 %v491
    %v583 = vpop.f32.mrf.mxu0
    %v584 = vadd.f32 %v499, %v583
    %v585 = vpop.f32.mrf.mxu0
    %v586 = vpop.f32.mrf.mxu0
    %v587 = vadd.f32 %v499, %v586
    %v588 = vpop.f32.mrf.mxu0
    %589 = vmatprep.mubr.bf16.mxu0 0
    %590 = vmatmul.mubr.bf16.gmra.mxu0 %v492
    %v591 = vpop.f32.mrf.mxu0
    %v592 = vadd.f32 %v499, %v591
    %v593 = vpop.f32.mrf.mxu0
    %v594 = vpop.f32.mrf.mxu0
    %v595 = vadd.f32 %v499, %v594
    %v596 = vpop.f32.mrf.mxu0
    %597 = vmatprep.mubr.bf16.mxu0 0
    %598 = vmatmul.mubr.bf16.gmra.mxu0 %v493
    %v599 = vpop.f32.mrf.mxu0
    %v600 = vadd.f32 %v499, %v599
    %v601 = vpop.f32.mrf.mxu0
    %v602 = vpop.f32.mrf.mxu0
    %v603 = vadd.f32 %v499, %v602
    %v604 = vpop.f32.mrf.mxu0
    %605 = vmatprep.mubr.bf16.mxu0 0
    %606 = vmatmul.mubr.bf16.gmra.mxu0 %v494
    %v607 = vpop.f32.mrf.mxu0
    %v608 = vadd.f32 %v499, %v607
    %v609 = vpop.f32.mrf.mxu0
    %v610 = vpop.f32.mrf.mxu0
    %v611 = vadd.f32 %v499, %v610
    %v612 = vpop.f32.mrf.mxu0
    %613 = vdwg.mxu0
    %v614 = vmax.f32 %v584, 0.0
    %v615 = vmax.f32 %v587, 0.0
    %v616 = vmax.f32 %v592, 0.0
    %v617 = vmax.f32 %v595, 0.0
    %v618 = vmax.f32 %v600, 0.0
    %v619 = vmax.f32 %v603, 0.0
    %v620 = vmax.f32 %v608, 0.0
    %v621 = vmax.f32 %v611, 0.0
    %v622 = vpack.c.bf16 %v615, %v614
    %v623 = vpack.c.bf16 %v617, %v616
    %v624 = vpack.c.bf16 %v619, %v618
    %v625 = vpack.c.bf16 %v621, %v620
    %v626 = vld [vmem:[#allocation10] sm:$0xf]
    %v627 = vld [vmem:[#allocation10 + $0x4] sm:$0xf]
    %v628 = vld [vmem:[#allocation10 + $0x8] sm:$0xf]
    %v629 = vld [vmem:[#allocation10 + $0xc] sm:$0xf]
    %v630 = vld [vmem:[#allocation10 + $0x10] sm:$0xf]
    %v631 = vld [vmem:[#allocation10 + $0x14] sm:$0xf]
    %v632 = vld [vmem:[#allocation10 + $0x18] sm:$0xf]
    %v633 = vld [vmem:[#allocation10 + $0x1c] sm:$0xf]
    %v634 = vld [vmem:[#allocation10 + $0x20] sm:$0xf]
    %v635 = vld [vmem:[#allocation10 + $0x24] sm:$0xf]
    %v636 = vld [vmem:[#allocation10 + $0x28] sm:$0xf]
    %v637 = vld [vmem:[#allocation10 + $0x2c] sm:$0xf]
    %v638 = vld [vmem:[#allocation10 + $0x30] sm:$0xf]
    %v639 = vld [vmem:[#allocation10 + $0x34] sm:$0xf]
    %v640 = vld [vmem:[#allocation10 + $0x38] sm:$0xf]
    %v641 = vld [vmem:[#allocation10 + $0x3c] sm:$0xf]
    %v642 = vld [vmem:[%s7] sm:$0x1]
    %643 = vmatprep.subr.bf16.mxu0 0
    %644 = vmatpush1.bf16.msra.mxu0 0
    %645 = vmatprep.subr.bf16.mxu0 0
    %646 = vmatpush1.bf16.msra.mxu0 0
    %647 = vmatprep.subr.bf16.mxu0 0
    %648 = vmatpush1.bf16.msra.mxu0 0
    %649 = vmatprep.subr.bf16.mxu0 0
    %650 = vmatpush1.bf16.msra.mxu0 0
    %651 = vmatprep.subr.bf16.mxu0 0
    %652 = vmatpush1.bf16.msra.mxu0 %v625
    %653 = vmatprep.subr.bf16.mxu0 0
    %654 = vmatpush1.bf16.msra.mxu0 %v624
    %655 = vmatprep.subr.bf16.mxu0 0
    %656 = vmatpush1.bf16.msra.mxu0 %v623
    %657 = vmatprep.subr.bf16.mxu0 0
    %658 = vmatpush1.bf16.msra.mxu0 %v622
    %659 = vmatprep.subr.bf16.mxu0 0
    %660 = vmatpush2.bf16.msra.mxu0 0
    %661 = vmatprep.subr.bf16.mxu0 0
    %662 = vmatpush2.bf16.msra.mxu0 0
    %663 = vmatprep.subr.bf16.mxu0 0
    %664 = vmatpush2.bf16.msra.mxu0 0
    %665 = vmatprep.subr.bf16.mxu0 0
    %666 = vmatpush2.bf16.msra.mxu0 0
    %667 = vmatprep.subr.bf16.mxu0 0
    %668 = vmatpush2.bf16.msra.mxu0 0
    %669 = vmatprep.subr.bf16.mxu0 0
    %670 = vmatpush2.bf16.msra.mxu0 0
    %671 = vmatprep.subr.bf16.mxu0 0
    %672 = vmatpush2.bf16.msra.mxu0 0
    %673 = vmatprep.subr.bf16.mxu0 0
    %674 = vmatpush2.bf16.msra.mxu0 0
    %675 = vmatprep.mubr.bf16.mxu0 0
    %676 = vmatmul.mubr.bf16.gmra.mxu0 %v198
    %v677 = vpop.f32.mrf.mxu0
    %v678 = vadd.f32 0.0, %v677
    %v679 = vpop.f32.mrf.mxu0
    %v680 = vpop.f32.mrf.mxu0
    %v681 = vadd.f32 0.0, %v680
    %v682 = vpop.f32.mrf.mxu0
    %683 = vmatprep.mubr.bf16.mxu0 0
    %684 = vmatmul.mubr.bf16.gmra.mxu0 %v201
    %v685 = vpop.f32.mrf.mxu0
    %v686 = vadd.f32 0.0, %v685
    %v687 = vpop.f32.mrf.mxu0
    %v688 = vpop.f32.mrf.mxu0
    %v689 = vadd.f32 0.0, %v688
    %v690 = vpop.f32.mrf.mxu0
    %691 = vmatprep.mubr.bf16.mxu0 0
    %692 = vmatmul.mubr.bf16.gmra.mxu0 %v204
    %v693 = vpop.f32.mrf.mxu0
    %v694 = vadd.f32 0.0, %v693
    %v695 = vpop.f32.mrf.mxu0
    %v696 = vpop.f32.mrf.mxu0
    %v697 = vadd.f32 0.0, %v696
    %v698 = vpop.f32.mrf.mxu0
    %699 = vmatprep.mubr.bf16.mxu0 0
    %700 = vmatmul.mubr.bf16.gmra.mxu0 %v207
    %v701 = vpop.f32.mrf.mxu0
    %v702 = vadd.f32 0.0, %v701
    %v703 = vpop.f32.mrf.mxu0
    %v704 = vpop.f32.mrf.mxu0
    %v705 = vadd.f32 0.0, %v704
    %v706 = vpop.f32.mrf.mxu0
    %707 = vdwg.mxu0
    %v708 = vpack.c.bf16 %v681, %v678
    %v709 = vpack.c.bf16 %v689, %v686
    %v710 = vpack.c.bf16 %v697, %v694
    %v711 = vpack.c.bf16 %v705, %v702
    %v713 = vlaneseq
    %v714 = vshrl.u32 %v713, 7
    %v715 = vsub.s32 0, %v714
    %v716 = vrot.slane %v642, %v715
    %v734 = vunpack.c.l.b16 %v626
    %v735 = vunpack.c.l.b16 %v627
    %v736 = vunpack.c.l.b16 %v628
    %v737 = vunpack.c.l.b16 %v629
    %v738 = vunpack.c.l.b16 %v630
    %v739 = vunpack.c.l.b16 %v631
    %v740 = vunpack.c.l.b16 %v632
    %v741 = vunpack.c.l.b16 %v633
    %v742 = vunpack.c.l.b16 %v634
    %v743 = vunpack.c.l.b16 %v635
    %v744 = vunpack.c.l.b16 %v636
    %v745 = vunpack.c.l.b16 %v637
    %v746 = vunpack.c.l.b16 %v638
    %v747 = vunpack.c.l.b16 %v639
    %v748 = vunpack.c.l.b16 %v640
    %v749 = vunpack.c.l.b16 %v641
    %v750 = vpack.c.b16 %v735, %v734
    %v751 = vpack.c.b16 %v737, %v736
    %v752 = vpack.c.b16 %v739, %v738
    %v753 = vpack.c.b16 %v741, %v740
    %v754 = vpack.c.b16 %v743, %v742
    %v755 = vpack.c.b16 %v745, %v744
    %v756 = vpack.c.b16 %v747, %v746
    %v757 = vpack.c.b16 %v749, %v748
    %766 = vmatprep.subr.bf16.mxu0 0
    %767 = vmatpush1.bf16.msra.mxu0 %v757
    %768 = vmatprep.subr.bf16.mxu0 0
    %769 = vmatpush1.bf16.msra.mxu0 %v756
    %770 = vmatprep.subr.bf16.mxu0 0
    %771 = vmatpush1.bf16.msra.mxu0 %v755
    %772 = vmatprep.subr.bf16.mxu0 0
    %773 = vmatpush1.bf16.msra.mxu0 %v754
    %774 = vmatprep.subr.bf16.mxu0 0
    %775 = vmatpush1.bf16.msra.mxu0 %v753
    %776 = vmatprep.subr.bf16.mxu0 0
    %777 = vmatpush1.bf16.msra.mxu0 %v752
    %778 = vmatprep.subr.bf16.mxu0 0
    %779 = vmatpush1.bf16.msra.mxu0 %v751
    %780 = vmatprep.subr.bf16.mxu0 0
    %781 = vmatpush1.bf16.msra.mxu0 %v750
    %782 = vmatprep.subr.bf16.mxu0 0
    %783 = vmatpush2.bf16.msra.mxu0 0
    %784 = vmatprep.subr.bf16.mxu0 0
    %785 = vmatpush2.bf16.msra.mxu0 0
    %786 = vmatprep.subr.bf16.mxu0 0
    %787 = vmatpush2.bf16.msra.mxu0 0
    %788 = vmatprep.subr.bf16.mxu0 0
    %789 = vmatpush2.bf16.msra.mxu0 0
    %790 = vmatprep.subr.bf16.mxu0 0
    %791 = vmatpush2.bf16.msra.mxu0 0
    %792 = vmatprep.subr.bf16.mxu0 0
    %793 = vmatpush2.bf16.msra.mxu0 0
    %794 = vmatprep.subr.bf16.mxu0 0
    %795 = vmatpush2.bf16.msra.mxu0 0
    %796 = vmatprep.subr.bf16.mxu0 0
    %797 = vmatpush2.bf16.msra.mxu0 0
    %798 = vmatprep.mubr.bf16.mxu0 0
    %799 = vmatmul.mubr.bf16.gmra.mxu0 %v708
    %v800 = vpop.f32.mrf.mxu0
    %v801 = vadd.f32 %v716, %v800
    %v802 = vpop.f32.mrf.mxu0
    %v803 = vpop.f32.mrf.mxu0
    %v804 = vadd.f32 %v716, %v803
    %v805 = vpop.f32.mrf.mxu0
    %806 = vmatprep.mubr.bf16.mxu0 0
    %807 = vmatmul.mubr.bf16.gmra.mxu0 %v709
    %v808 = vpop.f32.mrf.mxu0
    %v809 = vadd.f32 %v716, %v808
    %v810 = vpop.f32.mrf.mxu0
    %v811 = vpop.f32.mrf.mxu0
    %v812 = vadd.f32 %v716, %v811
    %v813 = vpop.f32.mrf.mxu0
    %814 = vmatprep.mubr.bf16.mxu0 0
    %815 = vmatmul.mubr.bf16.gmra.mxu0 %v710
    %v816 = vpop.f32.mrf.mxu0
    %v817 = vadd.f32 %v716, %v816
    %v818 = vpop.f32.mrf.mxu0
    %v819 = vpop.f32.mrf.mxu0
    %v820 = vadd.f32 %v716, %v819
    %v821 = vpop.f32.mrf.mxu0
    %822 = vmatprep.mubr.bf16.mxu0 0
    %823 = vmatmul.mubr.bf16.gmra.mxu0 %v711
    %v824 = vpop.f32.mrf.mxu0
    %v825 = vadd.f32 %v716, %v824
    %v826 = vpop.f32.mrf.mxu0
    %v827 = vpop.f32.mrf.mxu0
    %v828 = vadd.f32 %v716, %v827
    %v829 = vpop.f32.mrf.mxu0
    %830 = vdwg.mxu0
    %v831 = vpack.c.bf16 %v804, %v801
    %v832 = vpack.c.bf16 %v812, %v809
    %v833 = vpack.c.bf16 %v820, %v817
    %v834 = vpack.c.bf16 %v828, %v825
    %v835 = vld [vmem:[#allocation11] sm:$0xf]
    %v836 = vld [vmem:[#allocation11 + $0x4] sm:$0xf]
    %v837 = vld [vmem:[#allocation11 + $0x8] sm:$0xf]
    %v838 = vld [vmem:[#allocation11 + $0xc] sm:$0xf]
    %v839 = vld [vmem:[#allocation11 + $0x10] sm:$0xf]
    %v840 = vld [vmem:[#allocation11 + $0x14] sm:$0xf]
    %v841 = vld [vmem:[#allocation11 + $0x18] sm:$0xf]
    %v842 = vld [vmem:[#allocation11 + $0x1c] sm:$0xf]
    %v843 = vld [vmem:[#allocation11 + $0x20] sm:$0xf]
    %v844 = vld [vmem:[#allocation11 + $0x24] sm:$0xf]
    %v845 = vld [vmem:[#allocation11 + $0x28] sm:$0xf]
    %v846 = vld [vmem:[#allocation11 + $0x2c] sm:$0xf]
    %v847 = vld [vmem:[#allocation11 + $0x30] sm:$0xf]
    %v848 = vld [vmem:[#allocation11 + $0x34] sm:$0xf]
    %v849 = vld [vmem:[#allocation11 + $0x38] sm:$0xf]
    %v850 = vld [vmem:[#allocation11 + $0x3c] sm:$0xf]
    %v851 = vld [vmem:[%s9] sm:$0x1]
    %v853 = vlaneseq
    %v854 = vshrl.u32 %v853, 7
    %v855 = vsub.s32 0, %v854
    %v856 = vrot.slane %v851, %v855
    %v874 = vunpack.c.l.b16 %v835
    %v875 = vunpack.c.l.b16 %v836
    %v876 = vunpack.c.l.b16 %v837
    %v877 = vunpack.c.l.b16 %v838
    %v878 = vunpack.c.l.b16 %v839
    %v879 = vunpack.c.l.b16 %v840
    %v880 = vunpack.c.l.b16 %v841
    %v881 = vunpack.c.l.b16 %v842
    %v882 = vunpack.c.l.b16 %v843
    %v883 = vunpack.c.l.b16 %v844
    %v884 = vunpack.c.l.b16 %v845
    %v885 = vunpack.c.l.b16 %v846
    %v886 = vunpack.c.l.b16 %v847
    %v887 = vunpack.c.l.b16 %v848
    %v888 = vunpack.c.l.b16 %v849
    %v889 = vunpack.c.l.b16 %v850
    %v890 = vpack.c.b16 %v875, %v874
    %v891 = vpack.c.b16 %v877, %v876
    %v892 = vpack.c.b16 %v879, %v878
    %v893 = vpack.c.b16 %v881, %v880
    %v894 = vpack.c.b16 %v883, %v882
    %v895 = vpack.c.b16 %v885, %v884
    %v896 = vpack.c.b16 %v887, %v886
    %v897 = vpack.c.b16 %v889, %v888
    %906 = vmatprep.subr.bf16.mxu0 0
    %907 = vmatpush1.bf16.msra.mxu0 %v897
    %908 = vmatprep.subr.bf16.mxu0 0
    %909 = vmatpush1.bf16.msra.mxu0 %v896
    %910 = vmatprep.subr.bf16.mxu0 0
    %911 = vmatpush1.bf16.msra.mxu0 %v895
    %912 = vmatprep.subr.bf16.mxu0 0
    %913 = vmatpush1.bf16.msra.mxu0 %v894
    %914 = vmatprep.subr.bf16.mxu0 0
    %915 = vmatpush1.bf16.msra.mxu0 %v893
    %916 = vmatprep.subr.bf16.mxu0 0
    %917 = vmatpush1.bf16.msra.mxu0 %v892
    %918 = vmatprep.subr.bf16.mxu0 0
    %919 = vmatpush1.bf16.msra.mxu0 %v891
    %920 = vmatprep.subr.bf16.mxu0 0
    %921 = vmatpush1.bf16.msra.mxu0 %v890
    %922 = vmatprep.subr.bf16.mxu0 0
    %923 = vmatpush2.bf16.msra.mxu0 0
    %924 = vmatprep.subr.bf16.mxu0 0
    %925 = vmatpush2.bf16.msra.mxu0 0
    %926 = vmatprep.subr.bf16.mxu0 0
    %927 = vmatpush2.bf16.msra.mxu0 0
    %928 = vmatprep.subr.bf16.mxu0 0
    %929 = vmatpush2.bf16.msra.mxu0 0
    %930 = vmatprep.subr.bf16.mxu0 0
    %931 = vmatpush2.bf16.msra.mxu0 0
    %932 = vmatprep.subr.bf16.mxu0 0
    %933 = vmatpush2.bf16.msra.mxu0 0
    %934 = vmatprep.subr.bf16.mxu0 0
    %935 = vmatpush2.bf16.msra.mxu0 0
    %936 = vmatprep.subr.bf16.mxu0 0
    %937 = vmatpush2.bf16.msra.mxu0 0
    %938 = vmatprep.mubr.bf16.mxu0 0
    %939 = vmatmul.mubr.bf16.gmra.mxu0 %v831
    %v940 = vpop.f32.mrf.mxu0
    %v941 = vadd.f32 %v856, %v940
    %v942 = vpop.f32.mrf.mxu0
    %v943 = vpop.f32.mrf.mxu0
    %v944 = vadd.f32 %v856, %v943
    %v945 = vpop.f32.mrf.mxu0
    %946 = vmatprep.mubr.bf16.mxu0 0
    %947 = vmatmul.mubr.bf16.gmra.mxu0 %v832
    %v948 = vpop.f32.mrf.mxu0
    %v949 = vadd.f32 %v856, %v948
    %v950 = vpop.f32.mrf.mxu0
    %v951 = vpop.f32.mrf.mxu0
    %v952 = vadd.f32 %v856, %v951
    %v953 = vpop.f32.mrf.mxu0
    %954 = vmatprep.mubr.bf16.mxu0 0
    %955 = vmatmul.mubr.bf16.gmra.mxu0 %v833
    %v956 = vpop.f32.mrf.mxu0
    %v957 = vadd.f32 %v856, %v956
    %v958 = vpop.f32.mrf.mxu0
    %v959 = vpop.f32.mrf.mxu0
    %v960 = vadd.f32 %v856, %v959
    %v961 = vpop.f32.mrf.mxu0
    %962 = vmatprep.mubr.bf16.mxu0 0
    %963 = vmatmul.mubr.bf16.gmra.mxu0 %v834
    %v964 = vpop.f32.mrf.mxu0
    %v965 = vadd.f32 %v856, %v964
    %v966 = vpop.f32.mrf.mxu0
    %v967 = vpop.f32.mrf.mxu0
    %v968 = vadd.f32 %v856, %v967
    %v969 = vpop.f32.mrf.mxu0
    %970 = vdwg.mxu0
    %971 = vmax.xlane.f32.xlu0 %v941
    %v972 = vpop.xlane.xlu0 %971
    %973 = vmax.xlane.f32.xlu0 %v944
    %v974 = vpop.xlane.xlu0 %973
    %975 = vmax.xlane.f32.xlu0 %v949
    %v976 = vpop.xlane.xlu0 %975
    %977 = vmax.xlane.f32.xlu0 %v952
    %v978 = vpop.xlane.xlu0 %977
    %979 = vmax.xlane.f32.xlu0 %v957
    %v980 = vpop.xlane.xlu0 %979
    %981 = vmax.xlane.f32.xlu0 %v960
    %v982 = vpop.xlane.xlu0 %981
    %983 = vmax.xlane.f32.xlu0 %v965
    %v984 = vpop.xlane.xlu0 %983
    %985 = vmax.xlane.f32.xlu0 %v968
    %v986 = vpop.xlane.xlu0 %985
    %v987 = vsub.f32 %v941, %v972
    %v988 = vsub.f32 %v944, %v974
    %v989 = vsub.f32 %v949, %v976
    %v990 = vsub.f32 %v952, %v978
    %v991 = vsub.f32 %v957, %v980
    %v992 = vsub.f32 %v960, %v982
    %v993 = vsub.f32 %v965, %v984
    %v994 = vsub.f32 %v968, %v986
    %v995 = vmul.f32 %v987, 1.442695
    %v996 = vpow.pop %v995
    %v997 = vmul.f32 %v988, 1.442695
    %v998 = vpow.pop %v997
    %v999 = vmul.f32 %v989, 1.442695
    %v1000 = vpow.pop %v999
    %v1001 = vmul.f32 %v990, 1.442695
    %v1002 = vpow.pop %v1001
    %v1003 = vmul.f32 %v991, 1.442695
    %v1004 = vpow.pop %v1003
    %v1005 = vmul.f32 %v992, 1.442695
    %v1006 = vpow.pop %v1005
    %v1007 = vmul.f32 %v993, 1.442695
    %v1008 = vpow.pop %v1007
    %v1009 = vmul.f32 %v994, 1.442695
    %v1010 = vpow.pop %v1009
    %1011 = vadd.xlane.f32.xlu0 %v996
    %v1012 = vpop.xlane.xlu0 %1011
    %1013 = vadd.xlane.f32.xlu0 %v998
    %v1014 = vpop.xlane.xlu0 %1013
    %1015 = vadd.xlane.f32.xlu0 %v1000
    %v1016 = vpop.xlane.xlu0 %1015
    %1017 = vadd.xlane.f32.xlu0 %v1002
    %v1018 = vpop.xlane.xlu0 %1017
    %1019 = vadd.xlane.f32.xlu0 %v1004
    %v1020 = vpop.xlane.xlu0 %1019
    %1021 = vadd.xlane.f32.xlu0 %v1006
    %v1022 = vpop.xlane.xlu0 %1021
    %1023 = vadd.xlane.f32.xlu0 %v1008
    %v1024 = vpop.xlane.xlu0 %1023
    %1025 = vadd.xlane.f32.xlu0 %v1010
    %v1026 = vpop.xlane.xlu0 %1025
    %v1027 = vlog2.pop %v1012
    %v1028 = vmul.f32 %v1027, 0.6931472
    %v1029 = vlog2.pop %v1014
    %v1030 = vmul.f32 %v1029, 0.6931472
    %v1031 = vlog2.pop %v1016
    %v1032 = vmul.f32 %v1031, 0.6931472
    %v1033 = vlog2.pop %v1018
    %v1034 = vmul.f32 %v1033, 0.6931472
    %v1035 = vlog2.pop %v1020
    %v1036 = vmul.f32 %v1035, 0.6931472
    %v1037 = vlog2.pop %v1022
    %v1038 = vmul.f32 %v1037, 0.6931472
    %v1039 = vlog2.pop %v1024
    %v1040 = vmul.f32 %v1039, 0.6931472
    %v1041 = vlog2.pop %v1026
    %v1042 = vmul.f32 %v1041, 0.6931472
    %v1043 = vsub.f32 %v987, %v1028
    %v1044 = vsub.f32 %v988, %v1030
    %v1045 = vsub.f32 %v989, %v1032
    %v1046 = vsub.f32 %v990, %v1034
    %v1047 = vsub.f32 %v991, %v1036
    %v1048 = vsub.f32 %v992, %v1038
    %v1049 = vsub.f32 %v993, %v1040
    %v1050 = vsub.f32 %v994, %v1042
    %1051 = vst [vmem:[#allocation13] sm:$0xff] %v1043
    %1052 = vst [vmem:[#allocation13 + $0x8] sm:$0xff] %v1044
    %1053 = vst [vmem:[#allocation13 + $0x10] sm:$0xff] %v1045
    %1054 = vst [vmem:[#allocation13 + $0x18] sm:$0xff] %v1046
    %1055 = vst [vmem:[#allocation13 + $0x20] sm:$0xff] %v1047
    %1056 = vst [vmem:[#allocation13 + $0x28] sm:$0xff] %v1048
    %1057 = vst [vmem:[#allocation13 + $0x30] sm:$0xff] %v1049
    %1058 = vst [vmem:[#allocation13 + $0x38] sm:$0xff] %v1050
    // Predicated region
    $region66: #{tpu_custom_call.1} parent=1 // pred_check
      _
    $region67: #{tpu_custom_call.1} parent=1 // pred_check_branch
      %1060 = sbr.rel (0) target = $region69
    $region68: #{tpu_custom_call.1} parent=1 // pred_region
      %s1062 = ssub.s32 1024, 1024
      %1063 = vsyncadd [#allocation4], %s1062
      %s1064 = sshll.u32 [#allocation13], 4
      %s1065 = int_to_ptr.vmem [resolvable:$true] %s1064
      %1070 = dma.vmem_to_hbm [thread:$0]  %s1065, 1024, %s10, [#allocation4], 128, 128, 8
    $region69: #{tpu_custom_call.1} parent=1 // pred_fallthru
      _
    // Predicated region
    $region70: #{tpu_custom_call.1} parent=1 // pred_check
      _
    $region71: #{tpu_custom_call.1} parent=1 // pred_check_branch
      %1072 = sbr.rel (0) target = $region73
    $region72: #{tpu_custom_call.1} parent=1 // pred_region
      %1073 = dma.done [#allocation4], 1024
    $region73: #{tpu_custom_call.1} parent=1 // pred_fallthru
      _
    %1074 = vsyncpa [#allocation3], 1
    %1075 = vsyncpa [#allocation6], 1
    %1076 = vsyncpa [#allocation9], 1
    %1077 = vsyncpa [#allocation12], 1
    %1078 = vsyncpa [#allocation4], 1

</llo_original>
